<compile_context>
chip_gen: v7x
topology: tpu7x:2x2x1
jax: 0.10.0
libtpu: 0.0.40
codegen_flags: <defaults>
</compile_context>

<pallas_src>
import functools

import jax
import jax.numpy as jnp
from jax.experimental import pallas as pl
from jax.experimental.pallas import tpu as pltpu

LANE = 128


def _round_up(v, m):
    return ((v + m - 1) // m) * m


def _pad_to(x, target, axis):
    pad = target - x.shape[axis]
    if pad <= 0:
        return x
    widths = [(0, 0)] * x.ndim
    widths[axis] = (0, pad)
    return jnp.pad(x, widths)


def gcn4_kernel(a_ref, x_ref,
                w1r_ref, b1_ref, br_ref,
                w2_ref, b2_ref,
                w3_ref, b3_ref,
                w4_ref, b4_ref,
                wo_ref, bo_ref,
                out_ref, *, hp):
    # a:  [N, N]   bf16 weighted, degree-normalized adjacency (self-loops added)
    # x:  [N, hp]  bf16 node features (feature axis zero-padded to 128 lanes)
    a = a_ref[...]
    x = x_ref[...]

    # conv1 feature projection fused with the residual Linear:
    # one wide MXU matmul X @ [W1 | Wr], then split columns.
    xw = jnp.dot(x, w1r_ref[...], preferred_element_type=jnp.float32)   # [N, 2*hp]
    xw1 = xw[:, :hp]
    res = xw[:, hp:] + br_ref[...]                                      # residual (f32)

    # conv1: aggregate, bias, ReLU
    h = jnp.dot(a, xw1.astype(jnp.bfloat16), preferred_element_type=jnp.float32)
    h = jnp.maximum(h + b1_ref[...], 0.0)

    # conv2..conv4: aggregate-before-project ((A @ H) @ W), biases in f32.
    def conv(h_f32, w_ref, b_ref):
        ah = jnp.dot(a, h_f32.astype(jnp.bfloat16),
                     preferred_element_type=jnp.float32)
        return jnp.dot(ah.astype(jnp.bfloat16), w_ref[...],
                       preferred_element_type=jnp.float32) + b_ref[...]

    h = jnp.maximum(conv(h, w2_ref, b2_ref), 0.0)   # conv2 + ReLU
    h = jnp.maximum(conv(h, w3_ref, b3_ref), 0.0)   # conv3 + ReLU
    h = conv(h, w4_ref, b4_ref)                     # conv4 (no ReLU before residual)

    # residual add + ReLU, then output Linear (lane-dense 128-wide store).
    h = jnp.maximum(h + res, 0.0)
    out_ref[...] = jnp.dot(h.astype(jnp.bfloat16), wo_ref[...],
                           preferred_element_type=jnp.float32) + bo_ref[...]


def gcn4_forward(a_hat, x, params):
    (wr, br, w1, b1, w2, b2, w3, b3, w4, b4, wo, bo) = params
    n, in_feats = x.shape
    h1, h2, h3, h4 = w1.shape[1], w2.shape[1], w3.shape[1], w4.shape[1]
    num_classes = wo.shape[1]
    hp = _round_up(max(in_feats, h1, h2, h3, h4, num_classes), LANE)

    def pad_w(w):
        return _pad_to(_pad_to(w, hp, 0), hp, 1)

    def pad_b(b):
        return _pad_to(b.reshape(1, -1), hp, 1).astype(jnp.float32)

    # bf16 operands for the MXU (f32 accumulation happens in-kernel).
    a_bf = a_hat.astype(jnp.bfloat16)
    x_p = _pad_to(x, hp, 1).astype(jnp.bfloat16)
    # fuse conv1 weight with the residual projection: [in, h1] | [in, h4] -> [hp, 2*hp]
    w1r = jnp.concatenate([pad_w(w1), pad_w(wr)], axis=1).astype(jnp.bfloat16)
    w2_p = pad_w(w2).astype(jnp.bfloat16)
    w3_p = pad_w(w3).astype(jnp.bfloat16)
    w4_p = pad_w(w4).astype(jnp.bfloat16)
    wo_p = pad_w(wo).astype(jnp.bfloat16)
    b1_p, br_p, b2_p, b3_p, b4_p, bo_p = (pad_b(b) for b in (b1, br, b2, b3, b4, bo))

    # advisory cost hint for XLA's scheduler
    flops = 4 * 2 * n * n * hp + 2 * n * hp * (2 * hp) + 4 * 2 * n * hp * hp
    bytes_accessed = int(
        2 * (a_bf.size + x_p.size + w1r.size + w2_p.size + w3_p.size
             + w4_p.size + wo_p.size)
        + 4 * (6 * hp + n * hp))

    vmem = pl.BlockSpec(memory_space=pltpu.MemorySpace.VMEM)
    out_p = pl.pallas_call(
        functools.partial(gcn4_kernel, hp=hp),
        out_shape=jax.ShapeDtypeStruct((n, hp), jnp.float32),
        in_specs=[vmem] * 13,
        out_specs=vmem,
        compiler_params=pltpu.CompilerParams(
            # keep A_hat + all weights resident across the 4 aggregations;
            # raise above the conservative default scoped limit (16 MiB on v5e).
            vmem_limit_bytes=32 * 1024 * 1024),
        cost_estimate=pl.CostEstimate(flops=int(flops), transcendentals=0,
                                      bytes_accessed=bytes_accessed),
    )(a_bf, x_p, w1r, b1_p, br_p, w2_p, b2_p, w3_p, b3_p, w4_p, b4_p, wo_p, bo_p)

    return out_p[:, :num_classes]


def gcn4_reference(a_hat, x, params):
    (wr, br, w1, b1, w2, b2, w3, b3, w4, b4, wo, bo) = params
    res = x @ wr + br
    h = jax.nn.relu(a_hat @ (x @ w1) + b1)
    h = jax.nn.relu(a_hat @ (h @ w2) + b2)
    h = jax.nn.relu(a_hat @ (h @ w3) + b3)
    h = a_hat @ (h @ w4) + b4
    h = jax.nn.relu(h + res)
    return h @ wo + bo


def make_params(key, in_feats, h1, h2, h3, h4, num_classes):
    ks = jax.random.split(key, 6)

    def glorot(k, fi, fo):
        lim = jnp.sqrt(6.0 / (fi + fo))
        return jax.random.uniform(k, (fi, fo), jnp.float32, -lim, lim)

    wr = glorot(ks[0], in_feats, h4); br = jnp.zeros((h4,), jnp.float32)
    w1 = glorot(ks[1], in_feats, h1); b1 = jnp.zeros((h1,), jnp.float32)
    w2 = glorot(ks[2], h1, h2);       b2 = jnp.zeros((h2,), jnp.float32)
    w3 = glorot(ks[3], h2, h3);       b3 = jnp.zeros((h3,), jnp.float32)
    w4 = glorot(ks[4], h3, h4);       b4 = jnp.zeros((h4,), jnp.float32)
    wo = glorot(ks[5], h4, num_classes); bo = jnp.zeros((num_classes,), jnp.float32)
    return (wr, br, w1, b1, w2, b2, w3, b3, w4, b4, wo, bo)


def make_weighted_graph(key, n):
    # random symmetric graph with per-edge weights; DGL GraphConv(norm='both')
    # with edge_weight normalizes by the *weighted* degree, self-loops added.
    k_a, k_w = jax.random.split(key)
    mask = (jax.random.uniform(k_a, (n, n)) < 0.3).astype(jnp.float32)
    mask = jnp.maximum(mask, mask.T)
    ew = jax.random.uniform(k_w, (n, n), jnp.float32, 0.5, 1.5)
    ew = 0.5 * (ew + ew.T)                                   # symmetric edge weights
    a_w = mask * ew
    eye = jnp.eye(n, dtype=jnp.float32)
    a_w = a_w * (1.0 - eye) + eye                            # self-loop weight 1.0
    deg = a_w.sum(axis=1)                                    # weighted degree
    d_inv_sqrt = 1.0 / jnp.sqrt(deg)
    return a_w * d_inv_sqrt[:, None] * d_inv_sqrt[None, :]   # D^-1/2 (A*w) D^-1/2


if __name__ == "__main__":
    key = jax.random.PRNGKey(0)
    k_g, k_x, k_p = jax.random.split(key, 3)

    N = 16                 # nodes
    in_feats = 8
    h1, h2, h3, h4 = 16, 16, 32, 32
    num_classes = 4

    a_hat = make_weighted_graph(k_g, N)
    x = jax.random.normal(k_x, (N, in_feats), jnp.float32)
    params = make_params(k_p, in_feats, h1, h2, h3, h4, num_classes)

    out = gcn4_forward(a_hat, x, params)
    jax.block_until_ready(out)
    assert out.shape == (N, num_classes)

    ref = gcn4_reference(a_hat, x, params)
    assert bool(jnp.all(jnp.isfinite(out)))
    # bf16 MXU operands with f32 accumulation: generous tolerance vs f32 reference
    assert bool(jnp.allclose(out, ref, atol=5e-2, rtol=5e-2))

    print("KERNEL_OK")
</pallas_src>

<mosaic_0001>
module attributes {stable_mosaic.version = 11 : i64} {
  func.func @gcn4_kernel(%arg0: memref<16x16xbf16, #tpu.memory_space<vmem>>, %arg1: memref<16x128xbf16, #tpu.memory_space<vmem>>, %arg2: memref<128x256xbf16, #tpu.memory_space<vmem>>, %arg3: memref<1x128xf32, #tpu.memory_space<vmem>>, %arg4: memref<1x128xf32, #tpu.memory_space<vmem>>, %arg5: memref<128x128xbf16, #tpu.memory_space<vmem>>, %arg6: memref<1x128xf32, #tpu.memory_space<vmem>>, %arg7: memref<128x128xbf16, #tpu.memory_space<vmem>>, %arg8: memref<1x128xf32, #tpu.memory_space<vmem>>, %arg9: memref<128x128xbf16, #tpu.memory_space<vmem>>, %arg10: memref<1x128xf32, #tpu.memory_space<vmem>>, %arg11: memref<128x128xbf16, #tpu.memory_space<vmem>>, %arg12: memref<1x128xf32, #tpu.memory_space<vmem>>, %arg13: memref<16x128xf32, #tpu.memory_space<vmem>>) attributes {dimension_semantics = [], scalar_prefetch = 0 : i64, scratch_operands = 0 : i64, tpu.core_type = #tpu.core_type<tc>} {
    %c0 = arith.constant 0 : index
    %c0_0 = arith.constant 0 : index
    %0 = vector.load %arg0[%c0, %c0_0] : memref<16x16xbf16, #tpu.memory_space<vmem>>, vector<16x16xbf16>
    %c0_1 = arith.constant 0 : index
    %c0_2 = arith.constant 0 : index
    %1 = vector.load %arg1[%c0_1, %c0_2] : memref<16x128xbf16, #tpu.memory_space<vmem>>, vector<16x128xbf16>
    %c0_3 = arith.constant 0 : index
    %c0_4 = arith.constant 0 : index
    %2 = vector.load %arg2[%c0_3, %c0_4] : memref<128x256xbf16, #tpu.memory_space<vmem>>, vector<128x256xbf16>
    %cst = arith.constant dense<0.000000e+00> : vector<16x256xf32>
    %3 = tpu.matmul %1, %2, %cst {dimension_numbers = #tpu.dot_dimension_numbers<[1], [0], [0], [1], [0, 0, 1, 1], [], []>} : vector<16x128xbf16>, vector<128x256xbf16>, vector<16x256xf32> -> vector<16x256xf32>
    %4 = vector.extract_strided_slice %3 {offsets = [0, 0], sizes = [16, 128], strides = [1, 1]} : vector<16x256xf32> to vector<16x128xf32>
    %5 = vector.extract_strided_slice %3 {offsets = [0, 128], sizes = [16, 128], strides = [1, 1]} : vector<16x256xf32> to vector<16x128xf32>
    %c0_5 = arith.constant 0 : index
    %c0_6 = arith.constant 0 : index
    %6 = vector.load %arg4[%c0_5, %c0_6] : memref<1x128xf32, #tpu.memory_space<vmem>>, vector<1x128xf32>
    %7 = vector.broadcast %6 : vector<1x128xf32> to vector<16x128xf32>
    %8 = arith.addf %5, %7 : vector<16x128xf32>
    %9 = arith.truncf %4 : vector<16x128xf32> to vector<16x128xbf16>
    %cst_7 = arith.constant dense<0.000000e+00> : vector<16x128xf32>
    %10 = tpu.matmul %0, %9, %cst_7 {dimension_numbers = #tpu.dot_dimension_numbers<[1], [0], [0], [1], [0, 0, 1, 1], [], []>} : vector<16x16xbf16>, vector<16x128xbf16>, vector<16x128xf32> -> vector<16x128xf32>
    %c0_8 = arith.constant 0 : index
    %c0_9 = arith.constant 0 : index
    %11 = vector.load %arg3[%c0_8, %c0_9] : memref<1x128xf32, #tpu.memory_space<vmem>>, vector<1x128xf32>
    %12 = vector.broadcast %11 : vector<1x128xf32> to vector<16x128xf32>
    %13 = arith.addf %10, %12 : vector<16x128xf32>
    %cst_10 = arith.constant 0.000000e+00 : f32
    %14 = vector.broadcast %cst_10 : f32 to vector<16x128xf32>
    %15 = arith.maximumf %13, %14 : vector<16x128xf32>
    %16 = arith.truncf %15 : vector<16x128xf32> to vector<16x128xbf16>
    %cst_11 = arith.constant dense<0.000000e+00> : vector<16x128xf32>
    %17 = tpu.matmul %0, %16, %cst_11 {dimension_numbers = #tpu.dot_dimension_numbers<[1], [0], [0], [1], [0, 0, 1, 1], [], []>} : vector<16x16xbf16>, vector<16x128xbf16>, vector<16x128xf32> -> vector<16x128xf32>
    %18 = arith.truncf %17 : vector<16x128xf32> to vector<16x128xbf16>
    %c0_12 = arith.constant 0 : index
    %c0_13 = arith.constant 0 : index
    %19 = vector.load %arg5[%c0_12, %c0_13] : memref<128x128xbf16, #tpu.memory_space<vmem>>, vector<128x128xbf16>
    %cst_14 = arith.constant dense<0.000000e+00> : vector<16x128xf32>
    %20 = tpu.matmul %18, %19, %cst_14 {dimension_numbers = #tpu.dot_dimension_numbers<[1], [0], [0], [1], [0, 0, 1, 1], [], []>} : vector<16x128xbf16>, vector<128x128xbf16>, vector<16x128xf32> -> vector<16x128xf32>
    %c0_15 = arith.constant 0 : index
    %c0_16 = arith.constant 0 : index
    %21 = vector.load %arg6[%c0_15, %c0_16] : memref<1x128xf32, #tpu.memory_space<vmem>>, vector<1x128xf32>
    %22 = vector.broadcast %21 : vector<1x128xf32> to vector<16x128xf32>
    %23 = arith.addf %20, %22 : vector<16x128xf32>
    %cst_17 = arith.constant 0.000000e+00 : f32
    %24 = vector.broadcast %cst_17 : f32 to vector<16x128xf32>
    %25 = arith.maximumf %23, %24 : vector<16x128xf32>
    %26 = arith.truncf %25 : vector<16x128xf32> to vector<16x128xbf16>
    %cst_18 = arith.constant dense<0.000000e+00> : vector<16x128xf32>
    %27 = tpu.matmul %0, %26, %cst_18 {dimension_numbers = #tpu.dot_dimension_numbers<[1], [0], [0], [1], [0, 0, 1, 1], [], []>} : vector<16x16xbf16>, vector<16x128xbf16>, vector<16x128xf32> -> vector<16x128xf32>
    %28 = arith.truncf %27 : vector<16x128xf32> to vector<16x128xbf16>
    %c0_19 = arith.constant 0 : index
    %c0_20 = arith.constant 0 : index
    %29 = vector.load %arg7[%c0_19, %c0_20] : memref<128x128xbf16, #tpu.memory_space<vmem>>, vector<128x128xbf16>
    %cst_21 = arith.constant dense<0.000000e+00> : vector<16x128xf32>
    %30 = tpu.matmul %28, %29, %cst_21 {dimension_numbers = #tpu.dot_dimension_numbers<[1], [0], [0], [1], [0, 0, 1, 1], [], []>} : vector<16x128xbf16>, vector<128x128xbf16>, vector<16x128xf32> -> vector<16x128xf32>
    %c0_22 = arith.constant 0 : index
    %c0_23 = arith.constant 0 : index
    %31 = vector.load %arg8[%c0_22, %c0_23] : memref<1x128xf32, #tpu.memory_space<vmem>>, vector<1x128xf32>
    %32 = vector.broadcast %31 : vector<1x128xf32> to vector<16x128xf32>
    %33 = arith.addf %30, %32 : vector<16x128xf32>
    %cst_24 = arith.constant 0.000000e+00 : f32
    %34 = vector.broadcast %cst_24 : f32 to vector<16x128xf32>
    %35 = arith.maximumf %33, %34 : vector<16x128xf32>
    %36 = arith.truncf %35 : vector<16x128xf32> to vector<16x128xbf16>
    %cst_25 = arith.constant dense<0.000000e+00> : vector<16x128xf32>
    %37 = tpu.matmul %0, %36, %cst_25 {dimension_numbers = #tpu.dot_dimension_numbers<[1], [0], [0], [1], [0, 0, 1, 1], [], []>} : vector<16x16xbf16>, vector<16x128xbf16>, vector<16x128xf32> -> vector<16x128xf32>
    %38 = arith.truncf %37 : vector<16x128xf32> to vector<16x128xbf16>
    %c0_26 = arith.constant 0 : index
    %c0_27 = arith.constant 0 : index
    %39 = vector.load %arg9[%c0_26, %c0_27] : memref<128x128xbf16, #tpu.memory_space<vmem>>, vector<128x128xbf16>
    %cst_28 = arith.constant dense<0.000000e+00> : vector<16x128xf32>
    %40 = tpu.matmul %38, %39, %cst_28 {dimension_numbers = #tpu.dot_dimension_numbers<[1], [0], [0], [1], [0, 0, 1, 1], [], []>} : vector<16x128xbf16>, vector<128x128xbf16>, vector<16x128xf32> -> vector<16x128xf32>
    %c0_29 = arith.constant 0 : index
    %c0_30 = arith.constant 0 : index
    %41 = vector.load %arg10[%c0_29, %c0_30] : memref<1x128xf32, #tpu.memory_space<vmem>>, vector<1x128xf32>
    %42 = vector.broadcast %41 : vector<1x128xf32> to vector<16x128xf32>
    %43 = arith.addf %40, %42 : vector<16x128xf32>
    %44 = arith.addf %43, %8 : vector<16x128xf32>
    %cst_31 = arith.constant 0.000000e+00 : f32
    %45 = vector.broadcast %cst_31 : f32 to vector<16x128xf32>
    %46 = arith.maximumf %44, %45 : vector<16x128xf32>
    %47 = arith.truncf %46 : vector<16x128xf32> to vector<16x128xbf16>
    %c0_32 = arith.constant 0 : index
    %c0_33 = arith.constant 0 : index
    %48 = vector.load %arg11[%c0_32, %c0_33] : memref<128x128xbf16, #tpu.memory_space<vmem>>, vector<128x128xbf16>
    %cst_34 = arith.constant dense<0.000000e+00> : vector<16x128xf32>
    %49 = tpu.matmul %47, %48, %cst_34 {dimension_numbers = #tpu.dot_dimension_numbers<[1], [0], [0], [1], [0, 0, 1, 1], [], []>} : vector<16x128xbf16>, vector<128x128xbf16>, vector<16x128xf32> -> vector<16x128xf32>
    %c0_35 = arith.constant 0 : index
    %c0_36 = arith.constant 0 : index
    %50 = vector.load %arg12[%c0_35, %c0_36] : memref<1x128xf32, #tpu.memory_space<vmem>>, vector<1x128xf32>
    %51 = vector.broadcast %50 : vector<1x128xf32> to vector<16x128xf32>
    %52 = arith.addf %49, %51 : vector<16x128xf32>
    %c0_37 = arith.constant 0 : index
    %c0_38 = arith.constant 0 : index
    %53 = vector.load %arg13[%c0_37, %c0_38] : memref<16x128xf32, #tpu.memory_space<vmem>>, vector<16x128xf32>
    tpu.vector_store %arg13[%c0_37, %c0_38], %52 {strides = array<i32>} : memref<16x128xf32, #tpu.memory_space<vmem>>, vector<16x128xf32>,
    return
  }
}

</mosaic_0001>

<llo_original>
// kernel: tpu_custom_call.1
$region0: #{tpu_custom_call.1}
  #allocation0 [shape = 'u32[]', space=smem, size = 0x4, offset = 0x4, fixed_abs, tag = 'smem constant byte address 0x4 - core index']
  #allocation1 [shape = 'u32[144,128]{1,0:T(1,128)}', space=vmem, size = 0x12000, scoped, tag = 'internal scratch']
  %s0 = inlined_call_operand.hbm [shape: bf16[16,16], index: 0, kind: input, shape index: {}]
  %s1 = inlined_call_operand.hbm [shape: bf16[16,128], index: 1, kind: input, shape index: {}]
  %s2 = inlined_call_operand.hbm [shape: bf16[128,256], index: 2, kind: input, shape index: {}]
  %s3 = inlined_call_operand.vmem [shape: f32[1,128], index: 3, kind: input, shape index: {}]
  %s4 = inlined_call_operand.vmem [shape: f32[1,128], index: 4, kind: input, shape index: {}]
  %s5 = inlined_call_operand.hbm [shape: bf16[128,128], index: 5, kind: input, shape index: {}]
  %s6 = inlined_call_operand.vmem [shape: f32[1,128], index: 6, kind: input, shape index: {}]
  %s7 = inlined_call_operand.hbm [shape: bf16[128,128], index: 7, kind: input, shape index: {}]
  %s8 = inlined_call_operand.vmem [shape: f32[1,128], index: 8, kind: input, shape index: {}]
  %s9 = inlined_call_operand.hbm [shape: bf16[128,128], index: 9, kind: input, shape index: {}]
  %s10 = inlined_call_operand.vmem [shape: f32[1,128], index: 10, kind: input, shape index: {}]
  %s11 = inlined_call_operand.hbm [shape: bf16[128,128], index: 11, kind: input, shape index: {}]
  %s12 = inlined_call_operand.vmem [shape: f32[1,128], index: 12, kind: input, shape index: {}]
  %s13 = inlined_call_operand.hbm [shape: f32[16,128], index: 13, kind: output, shape index: {}]
  %s14 = sld [smem:[#allocation0]]
  $region90: #{tpu_custom_call.1} parent=0
    _
  %s16 = ssub.s32 1, %s14
  %s17 = scalar_select 0, %s16, %s14
  $region1: #{tpu_custom_call.1} parent=0
    #allocation2 [shape = 'u8[4096]{0}', space=vmem, size = 0x1000, scoped, tag = 'input window, operand 0, single buffered']
    #allocation3 [shape = 's32[1]{0}', space=sflag, size = 0x4, scoped, tag = 'scoped memory for tpu_custom_call.1']
    #allocation4 [shape = 's32[1]{0}', space=sflag, size = 0x4, scoped, tag = 'scoped memory for tpu_custom_call.1']
    #allocation5 [shape = 'u8[4096]{0}', space=vmem, size = 0x1000, scoped, tag = 'input window, operand 1, single buffered']
    #allocation6 [shape = 's32[1]{0}', space=sflag, size = 0x4, scoped, tag = 'scoped memory for tpu_custom_call.1']
    #allocation7 [shape = 'u8[65536]{0}', space=vmem, size = 0x10000, scoped, tag = 'input window, operand 2, single buffered']
    #allocation8 [shape = 'u8[32768]{0}', space=vmem, size = 0x8000, scoped, tag = 'input window, operand 5, single buffered']
    #allocation9 [shape = 's32[1]{0}', space=sflag, size = 0x4, scoped, tag = 'scoped memory for tpu_custom_call.1']
    #allocation10 [shape = 'u8[32768]{0}', space=vmem, size = 0x8000, scoped, tag = 'input window, operand 7, single buffered']
    #allocation11 [shape = 'u8[32768]{0}', space=vmem, size = 0x8000, scoped, tag = 'input window, operand 9, single buffered']
    #allocation12 [shape = 's32[1]{0}', space=sflag, size = 0x4, scoped, tag = 'scoped memory for tpu_custom_call.1']
    #allocation13 [shape = 'u8[32768]{0}', space=vmem, size = 0x8000, scoped, tag = 'input window, operand 11, single buffered']
    #allocation14 [shape = 'u8[8192]{0}', space=vmem, size = 0x2000, scoped, tag = 'output window, operand 0, single buffered']
    %18 = vsyncpa [#allocation3], 0
    %19 = vsyncpa [#allocation6], 0
    %20 = vsyncpa [#allocation9], 0
    %21 = vsyncpa [#allocation12], 0
    %22 = vsyncpa [#allocation4], 0
    // Predicated region
    $region2: #{tpu_custom_call.1} parent=1 // pred_check
      _
    $region3: #{tpu_custom_call.1} parent=1 // pred_check_branch
      %24 = sbr.rel (0) target = $region5
    $region4: #{tpu_custom_call.1} parent=1 // pred_region
      %s26 = ssub.s32 128, 128
      %27 = vsyncadd [#allocation3], %s26
      %s28 = sshll.u32 [#allocation2], 4
      %s29 = int_to_ptr.vmem [resolvable:$true] %s28
      %34 = dma.hbm_to_vmem [thread:$0]  %s0, 128, %s29, [#allocation3], 64, 64, 4
    $region5: #{tpu_custom_call.1} parent=1 // pred_fallthru
      _
    // Predicated region
    $region6: #{tpu_custom_call.1} parent=1 // pred_check
      _
    $region7: #{tpu_custom_call.1} parent=1 // pred_check_branch
      %36 = sbr.rel (0) target = $region9
    $region8: #{tpu_custom_call.1} parent=1 // pred_region
      %s38 = ssub.s32 128, 128
      %39 = vsyncadd [#allocation6], %s38
      %s40 = sshll.u32 [#allocation5], 4
      %s41 = int_to_ptr.vmem [resolvable:$true] %s40
      %46 = dma.hbm_to_vmem [thread:$0]  %s1, 128, %s41, [#allocation6], 64, 64, 4
    $region9: #{tpu_custom_call.1} parent=1 // pred_fallthru
      _
    // Predicated region
    $region10: #{tpu_custom_call.1} parent=1 // pred_check
      _
    $region11: #{tpu_custom_call.1} parent=1 // pred_check_branch
      %48 = sbr.rel (0) target = $region13
    $region12: #{tpu_custom_call.1} parent=1 // pred_region
      %s50 = ssub.s32 2048, 2048
      %51 = vsyncadd [#allocation6], %s50
      %s52 = sshll.u32 [#allocation7], 4
      %s53 = int_to_ptr.vmem [resolvable:$true] %s52
      %58 = dma.hbm_to_vmem [thread:$0]  %s2, 2048, %s53, [#allocation6], 128, 128, 8
    $region13: #{tpu_custom_call.1} parent=1 // pred_fallthru
      _
    // Predicated region
    $region14: #{tpu_custom_call.1} parent=1 // pred_check
      _
    $region15: #{tpu_custom_call.1} parent=1 // pred_check_branch
      %60 = sbr.rel (0) target = $region17
    $region16: #{tpu_custom_call.1} parent=1 // pred_region
      _
    $region17: #{tpu_custom_call.1} parent=1 // pred_fallthru
      _
    // Predicated region
    $region18: #{tpu_custom_call.1} parent=1 // pred_check
      _
    $region19: #{tpu_custom_call.1} parent=1 // pred_check_branch
      %62 = sbr.rel (0) target = $region21
    $region20: #{tpu_custom_call.1} parent=1 // pred_region
      _
    $region21: #{tpu_custom_call.1} parent=1 // pred_fallthru
      _
    // Predicated region
    $region22: #{tpu_custom_call.1} parent=1 // pred_check
      _
    $region23: #{tpu_custom_call.1} parent=1 // pred_check_branch
      %64 = sbr.rel (0) target = $region25
    $region24: #{tpu_custom_call.1} parent=1 // pred_region
      %s66 = ssub.s32 1024, 1024
      %67 = vsyncadd [#allocation9], %s66
      %s68 = sshll.u32 [#allocation8], 4
      %s69 = int_to_ptr.vmem [resolvable:$true] %s68
      %74 = dma.hbm_to_vmem [thread:$0]  %s5, 1024, %s69, [#allocation9], 64, 64, 4
    $region25: #{tpu_custom_call.1} parent=1 // pred_fallthru
      _
    // Predicated region
    $region26: #{tpu_custom_call.1} parent=1 // pred_check
      _
    $region27: #{tpu_custom_call.1} parent=1 // pred_check_branch
      %76 = sbr.rel (0) target = $region29
    $region28: #{tpu_custom_call.1} parent=1 // pred_region
      _
    $region29: #{tpu_custom_call.1} parent=1 // pred_fallthru
      _
    // Predicated region
    $region30: #{tpu_custom_call.1} parent=1 // pred_check
      _
    $region31: #{tpu_custom_call.1} parent=1 // pred_check_branch
      %78 = sbr.rel (0) target = $region33
    $region32: #{tpu_custom_call.1} parent=1 // pred_region
      %s80 = ssub.s32 1024, 1024
      %81 = vsyncadd [#allocation9], %s80
      %s82 = sshll.u32 [#allocation10], 4
      %s83 = int_to_ptr.vmem [resolvable:$true] %s82
      %88 = dma.hbm_to_vmem [thread:$0]  %s7, 1024, %s83, [#allocation9], 64, 64, 4
    $region33: #{tpu_custom_call.1} parent=1 // pred_fallthru
      _
    // Predicated region
    $region34: #{tpu_custom_call.1} parent=1 // pred_check
      _
    $region35: #{tpu_custom_call.1} parent=1 // pred_check_branch
      %90 = sbr.rel (0) target = $region37
    $region36: #{tpu_custom_call.1} parent=1 // pred_region
      _
    $region37: #{tpu_custom_call.1} parent=1 // pred_fallthru
      _
    // Predicated region
    $region38: #{tpu_custom_call.1} parent=1 // pred_check
      _
    $region39: #{tpu_custom_call.1} parent=1 // pred_check_branch
      %92 = sbr.rel (0) target = $region41
    $region40: #{tpu_custom_call.1} parent=1 // pred_region
      %s94 = ssub.s32 1024, 1024
      %95 = vsyncadd [#allocation12], %s94
      %s96 = sshll.u32 [#allocation11], 4
      %s97 = int_to_ptr.vmem [resolvable:$true] %s96
      %102 = dma.hbm_to_vmem [thread:$0]  %s9, 1024, %s97, [#allocation12], 64, 64, 4
    $region41: #{tpu_custom_call.1} parent=1 // pred_fallthru
      _
    // Predicated region
    $region42: #{tpu_custom_call.1} parent=1 // pred_check
      _
    $region43: #{tpu_custom_call.1} parent=1 // pred_check_branch
      %104 = sbr.rel (0) target = $region45
    $region44: #{tpu_custom_call.1} parent=1 // pred_region
      _
    $region45: #{tpu_custom_call.1} parent=1 // pred_fallthru
      _
    // Predicated region
    $region46: #{tpu_custom_call.1} parent=1 // pred_check
      _
    $region47: #{tpu_custom_call.1} parent=1 // pred_check_branch
      %106 = sbr.rel (0) target = $region49
    $region48: #{tpu_custom_call.1} parent=1 // pred_region
      %s108 = ssub.s32 1024, 1024
      %109 = vsyncadd [#allocation12], %s108
      %s110 = sshll.u32 [#allocation13], 4
      %s111 = int_to_ptr.vmem [resolvable:$true] %s110
      %116 = dma.hbm_to_vmem [thread:$0]  %s11, 1024, %s111, [#allocation12], 64, 64, 4
    $region49: #{tpu_custom_call.1} parent=1 // pred_fallthru
      _
    // Predicated region
    $region50: #{tpu_custom_call.1} parent=1 // pred_check
      _
    $region51: #{tpu_custom_call.1} parent=1 // pred_check_branch
      %118 = sbr.rel (0) target = $region53
    $region52: #{tpu_custom_call.1} parent=1 // pred_region
      _
    $region53: #{tpu_custom_call.1} parent=1 // pred_fallthru
      _
    // Predicated region
    $region54: #{tpu_custom_call.1} parent=1 // pred_check
      _
    $region55: #{tpu_custom_call.1} parent=1 // pred_check_branch
      %120 = sbr.rel (0) target = $region57
    $region56: #{tpu_custom_call.1} parent=1 // pred_region
      %121 = dma.done [#allocation3], 128
    $region57: #{tpu_custom_call.1} parent=1 // pred_fallthru
      _
    // Predicated region
    $region58: #{tpu_custom_call.1} parent=1 // pred_check
      _
    $region59: #{tpu_custom_call.1} parent=1 // pred_check_branch
      %123 = sbr.rel (0) target = $region61
    $region60: #{tpu_custom_call.1} parent=1 // pred_region
      %124 = dma.done [#allocation6], 128
    $region61: #{tpu_custom_call.1} parent=1 // pred_fallthru
      _
    // Predicated region
    $region62: #{tpu_custom_call.1} parent=1 // pred_check
      _
    $region63: #{tpu_custom_call.1} parent=1 // pred_check_branch
      %126 = sbr.rel (0) target = $region65
    $region64: #{tpu_custom_call.1} parent=1 // pred_region
      %127 = dma.done [#allocation6], 2048
    $region65: #{tpu_custom_call.1} parent=1 // pred_fallthru
      _
    // Predicated region
    $region66: #{tpu_custom_call.1} parent=1 // pred_check
      _
    $region67: #{tpu_custom_call.1} parent=1 // pred_check_branch
      %129 = sbr.rel (0) target = $region69
    $region68: #{tpu_custom_call.1} parent=1 // pred_region
      %130 = dma.done [#allocation9], 1024
    $region69: #{tpu_custom_call.1} parent=1 // pred_fallthru
      _
    // Predicated region
    $region70: #{tpu_custom_call.1} parent=1 // pred_check
      _
    $region71: #{tpu_custom_call.1} parent=1 // pred_check_branch
      %132 = sbr.rel (0) target = $region73
    $region72: #{tpu_custom_call.1} parent=1 // pred_region
      %133 = dma.done [#allocation9], 1024
    $region73: #{tpu_custom_call.1} parent=1 // pred_fallthru
      _
    // Predicated region
    $region74: #{tpu_custom_call.1} parent=1 // pred_check
      _
    $region75: #{tpu_custom_call.1} parent=1 // pred_check_branch
      %135 = sbr.rel (0) target = $region77
    $region76: #{tpu_custom_call.1} parent=1 // pred_region
      %136 = dma.done [#allocation12], 1024
    $region77: #{tpu_custom_call.1} parent=1 // pred_fallthru
      _
    // Predicated region
    $region78: #{tpu_custom_call.1} parent=1 // pred_check
      _
    $region79: #{tpu_custom_call.1} parent=1 // pred_check_branch
      %138 = sbr.rel (0) target = $region81
    $region80: #{tpu_custom_call.1} parent=1 // pred_region
      %139 = dma.done [#allocation12], 1024
    $region81: #{tpu_custom_call.1} parent=1 // pred_fallthru
      _
    %v141 = vld [vmem:[#allocation2] sm:$0xf]
    %v142 = vld [vmem:[#allocation2 + $0x4] sm:$0xf]
    %v143 = vld [vmem:[#allocation5] sm:$0xf]
    %v144 = vld [vmem:[#allocation5 + $0x4] sm:$0xf]
    %v145 = vld [vmem:[#allocation7] sm:$0xff]
    %v146 = vld [vmem:[#allocation7 + $0x8] sm:$0xff]
    %v147 = vld [vmem:[#allocation7 + $0x10] sm:$0xff]
    %v148 = vld [vmem:[#allocation7 + $0x18] sm:$0xff]
    %v149 = vld [vmem:[#allocation7 + $0x20] sm:$0xff]
    %v150 = vld [vmem:[#allocation7 + $0x28] sm:$0xff]
    %v151 = vld [vmem:[#allocation7 + $0x30] sm:$0xff]
    %v152 = vld [vmem:[#allocation7 + $0x38] sm:$0xff]
    %v153 = vld [vmem:[#allocation7 + $0x40] sm:$0xff]
    %v154 = vld [vmem:[#allocation7 + $0x48] sm:$0xff]
    %v155 = vld [vmem:[#allocation7 + $0x50] sm:$0xff]
    %v156 = vld [vmem:[#allocation7 + $0x58] sm:$0xff]
    %v157 = vld [vmem:[#allocation7 + $0x60] sm:$0xff]
    %v158 = vld [vmem:[#allocation7 + $0x68] sm:$0xff]
    %v159 = vld [vmem:[#allocation7 + $0x70] sm:$0xff]
    %v160 = vld [vmem:[#allocation7 + $0x78] sm:$0xff]
    %v163 = vunpack.c.l.b16 %v143
    %v164 = vunpack.c.l.b16 %v144
    %v165 = vpack.c.b16 %v164, %v163
    %v183 = vunpack.c.l.b16 %v145
    %v184 = vunpack.c.h.b16 %v145
    %v185 = vunpack.c.l.b16 %v146
    %v186 = vunpack.c.h.b16 %v146
    %v187 = vunpack.c.l.b16 %v147
    %v188 = vunpack.c.h.b16 %v147
    %v189 = vunpack.c.l.b16 %v148
    %v190 = vunpack.c.h.b16 %v148
    %v191 = vunpack.c.l.b16 %v149
    %v192 = vunpack.c.h.b16 %v149
    %v193 = vunpack.c.l.b16 %v150
    %v194 = vunpack.c.h.b16 %v150
    %v195 = vunpack.c.l.b16 %v151
    %v196 = vunpack.c.h.b16 %v151
    %v197 = vunpack.c.l.b16 %v152
    %v198 = vunpack.c.h.b16 %v152
    %v199 = vunpack.c.l.b16 %v153
    %v200 = vunpack.c.h.b16 %v153
    %v201 = vunpack.c.l.b16 %v154
    %v202 = vunpack.c.h.b16 %v154
    %v203 = vunpack.c.l.b16 %v155
    %v204 = vunpack.c.h.b16 %v155
    %v205 = vunpack.c.l.b16 %v156
    %v206 = vunpack.c.h.b16 %v156
    %v207 = vunpack.c.l.b16 %v157
    %v208 = vunpack.c.h.b16 %v157
    %v209 = vunpack.c.l.b16 %v158
    %v210 = vunpack.c.h.b16 %v158
    %v211 = vunpack.c.l.b16 %v159
    %v212 = vunpack.c.h.b16 %v159
    %v213 = vunpack.c.l.b16 %v160
    %v214 = vunpack.c.h.b16 %v160
    %v215 = vpack.c.b16 %v185, %v183
    %v216 = vpack.c.b16 %v186, %v184
    %v217 = vpack.c.b16 %v189, %v187
    %v218 = vpack.c.b16 %v190, %v188
    %v219 = vpack.c.b16 %v193, %v191
    %v220 = vpack.c.b16 %v194, %v192
    %v221 = vpack.c.b16 %v197, %v195
    %v222 = vpack.c.b16 %v198, %v196
    %v223 = vpack.c.b16 %v201, %v199
    %v224 = vpack.c.b16 %v202, %v200
    %v225 = vpack.c.b16 %v205, %v203
    %v226 = vpack.c.b16 %v206, %v204
    %v227 = vpack.c.b16 %v209, %v207
    %v228 = vpack.c.b16 %v210, %v208
    %v229 = vpack.c.b16 %v213, %v211
    %v230 = vpack.c.b16 %v214, %v212
    %247 = vmatprep.subr.bf16.mxu0 %v216
    %248 = vmatpush1.bf16.msra.mxu0 %v215
    %249 = vmatprep.subr.bf16.mxu0 %v218
    %250 = vmatpush1.bf16.msra.mxu0 %v217
    %251 = vmatprep.subr.bf16.mxu0 %v220
    %252 = vmatpush1.bf16.msra.mxu0 %v219
    %253 = vmatprep.subr.bf16.mxu0 %v222
    %254 = vmatpush1.bf16.msra.mxu0 %v221
    %255 = vmatprep.subr.bf16.mxu0 %v224
    %256 = vmatpush1.bf16.msra.mxu0 %v223
    %257 = vmatprep.subr.bf16.mxu0 %v226
    %258 = vmatpush1.bf16.msra.mxu0 %v225
    %259 = vmatprep.subr.bf16.mxu0 %v228
    %260 = vmatpush1.bf16.msra.mxu0 %v227
    %261 = vmatprep.subr.bf16.mxu0 %v230
    %262 = vmatpush1.bf16.msra.mxu0 %v229
    %263 = vmatprep.subr.bf16.mxu0 0
    %264 = vmatpush1.bf16.msra.mxu0 0
    %265 = vmatprep.subr.bf16.mxu0 0
    %266 = vmatpush1.bf16.msra.mxu0 0
    %267 = vmatprep.subr.bf16.mxu0 0
    %268 = vmatpush1.bf16.msra.mxu0 0
    %269 = vmatprep.subr.bf16.mxu0 0
    %270 = vmatpush1.bf16.msra.mxu0 0
    %271 = vmatprep.subr.bf16.mxu0 0
    %272 = vmatpush1.bf16.msra.mxu0 0
    %273 = vmatprep.subr.bf16.mxu0 0
    %274 = vmatpush1.bf16.msra.mxu0 0
    %275 = vmatprep.subr.bf16.mxu0 0
    %276 = vmatpush1.bf16.msra.mxu0 0
    %277 = vmatprep.subr.bf16.mxu0 0
    %278 = vmatpush1.bf16.msra.mxu0 0
    %279 = vmatprep.mubr.bf16.mxu0 0
    %280 = vmatmul.mubr.bf16.gmra.mrb[0].mxu0 %v165
    %v281 = vpop.f32.mrb[0].mxu0
    %v282 = vadd.f32 0.0, %v281
    %v283 = vpop.f32.mrb[0].mxu0
    %v284 = vadd.f32 0.0, %v283
    %v285 = vpop.f32.mrb[0].mxu0
    %v286 = vadd.f32 0.0, %v285
    %v287 = vpop.f32.mrb[0].mxu0
    %v288 = vadd.f32 0.0, %v287
    %289 = vdwg.mxu0
    %v290 = vld [vmem:[%s4] sm:$0x1]
    %v292 = vlaneseq
    %v293 = vshrl.u32 %v292, 7
    %v294 = vsub.s32 0, %v293
    %v295 = vrot.slane %v290, %v294
    %v297 = vadd.f32 %v284, %v295
    %v298 = vadd.f32 %v288, %v295
    %v299 = vpack.c.bf16 %v286, %v282
    %v300 = vld [vmem:[%s3] sm:$0x1]
    %v302 = vlaneseq
    %v303 = vshrl.u32 %v302, 7
    %v304 = vsub.s32 0, %v303
    %v305 = vrot.slane %v300, %v304
    %v309 = vunpack.c.l.b16 %v141
    %v310 = vunpack.c.l.b16 %v142
    %v311 = vpack.c.b16 %v310, %v309
    %vm312 = vcmask 130048
    %v314 = vsel %vm312, %v311, 0
    %316 = vmatprep.subr.bf16.mxu0 0
    %317 = vmatpush1.bf16.msra.mxu0 %v299
    %318 = vmatprep.subr.bf16.mxu0 0
    %319 = vmatpush1.bf16.msra.mxu0 0
    %320 = vmatprep.subr.bf16.mxu0 0
    %321 = vmatpush1.bf16.msra.mxu0 0
    %322 = vmatprep.subr.bf16.mxu0 0
    %323 = vmatpush1.bf16.msra.mxu0 0
    %324 = vmatprep.subr.bf16.mxu0 0
    %325 = vmatpush1.bf16.msra.mxu0 0
    %326 = vmatprep.subr.bf16.mxu0 0
    %327 = vmatpush1.bf16.msra.mxu0 0
    %328 = vmatprep.subr.bf16.mxu0 0
    %329 = vmatpush1.bf16.msra.mxu0 0
    %330 = vmatprep.subr.bf16.mxu0 0
    %331 = vmatpush1.bf16.msra.mxu0 0
    %332 = vmatprep.subr.bf16.mxu0 0
    %333 = vmatpush1.bf16.msra.mxu0 0
    %334 = vmatprep.subr.bf16.mxu0 0
    %335 = vmatpush1.bf16.msra.mxu0 0
    %336 = vmatprep.subr.bf16.mxu0 0
    %337 = vmatpush1.bf16.msra.mxu0 0
    %338 = vmatprep.subr.bf16.mxu0 0
    %339 = vmatpush1.bf16.msra.mxu0 0
    %340 = vmatprep.subr.bf16.mxu0 0
    %341 = vmatpush1.bf16.msra.mxu0 0
    %342 = vmatprep.subr.bf16.mxu0 0
    %343 = vmatpush1.bf16.msra.mxu0 0
    %344 = vmatprep.subr.bf16.mxu0 0
    %345 = vmatpush1.bf16.msra.mxu0 0
    %346 = vmatprep.subr.bf16.mxu0 0
    %347 = vmatpush1.bf16.msra.mxu0 0
    %348 = vmatprep.mubr.bf16.mxu0 0
    %349 = vmatmul.mubr.bf16.gmra.mrb[0].mxu0 %v314
    %v350 = vpop.f32.mrb[0].mxu0
    %v351 = vadd.f32 %v305, %v350
    %v352 = vpop.f32.mrb[0].mxu0
    %v353 = vpop.f32.mrb[0].mxu0
    %v354 = vadd.f32 %v305, %v353
    %v355 = vpop.f32.mrb[0].mxu0
    %356 = vdwg.mxu0
    %v357 = vmax.f32 %v351, 0.0
    %v358 = vmax.f32 %v354, 0.0
    %v359 = vpack.c.bf16 %v358, %v357
    %360 = vmatprep.subr.bf16.mxu0 0
    %361 = vmatpush1.bf16.msra.mxu0 %v359
    %362 = vmatprep.subr.bf16.mxu0 0
    %363 = vmatpush1.bf16.msra.mxu0 0
    %364 = vmatprep.subr.bf16.mxu0 0
    %365 = vmatpush1.bf16.msra.mxu0 0
    %366 = vmatprep.subr.bf16.mxu0 0
    %367 = vmatpush1.bf16.msra.mxu0 0
    %368 = vmatprep.subr.bf16.mxu0 0
    %369 = vmatpush1.bf16.msra.mxu0 0
    %370 = vmatprep.subr.bf16.mxu0 0
    %371 = vmatpush1.bf16.msra.mxu0 0
    %372 = vmatprep.subr.bf16.mxu0 0
    %373 = vmatpush1.bf16.msra.mxu0 0
    %374 = vmatprep.subr.bf16.mxu0 0
    %375 = vmatpush1.bf16.msra.mxu0 0
    %376 = vmatprep.subr.bf16.mxu0 0
    %377 = vmatpush1.bf16.msra.mxu0 0
    %378 = vmatprep.subr.bf16.mxu0 0
    %379 = vmatpush1.bf16.msra.mxu0 0
    %380 = vmatprep.subr.bf16.mxu0 0
    %381 = vmatpush1.bf16.msra.mxu0 0
    %382 = vmatprep.subr.bf16.mxu0 0
    %383 = vmatpush1.bf16.msra.mxu0 0
    %384 = vmatprep.subr.bf16.mxu0 0
    %385 = vmatpush1.bf16.msra.mxu0 0
    %386 = vmatprep.subr.bf16.mxu0 0
    %387 = vmatpush1.bf16.msra.mxu0 0
    %388 = vmatprep.subr.bf16.mxu0 0
    %389 = vmatpush1.bf16.msra.mxu0 0
    %390 = vmatprep.subr.bf16.mxu0 0
    %391 = vmatpush1.bf16.msra.mxu0 0
    %392 = vmatprep.mubr.bf16.mxu0 0
    %393 = vmatmul.mubr.bf16.gmra.mrb[0].mxu0 %v314
    %v394 = vpop.f32.mrb[0].mxu0
    %v395 = vadd.f32 0.0, %v394
    %v396 = vpop.f32.mrb[0].mxu0
    %v397 = vpop.f32.mrb[0].mxu0
    %v398 = vadd.f32 0.0, %v397
    %v399 = vpop.f32.mrb[0].mxu0
    %400 = vdwg.mxu0
    %v401 = vpack.c.bf16 %v398, %v395
    %v402 = vld [vmem:[#allocation8] sm:$0xf]
    %v403 = vld [vmem:[#allocation8 + $0x4] sm:$0xf]
    %v404 = vld [vmem:[#allocation8 + $0x8] sm:$0xf]
    %v405 = vld [vmem:[#allocation8 + $0xc] sm:$0xf]
    %v406 = vld [vmem:[#allocation8 + $0x10] sm:$0xf]
    %v407 = vld [vmem:[#allocation8 + $0x14] sm:$0xf]
    %v408 = vld [vmem:[#allocation8 + $0x18] sm:$0xf]
    %v409 = vld [vmem:[#allocation8 + $0x1c] sm:$0xf]
    %v410 = vld [vmem:[#allocation8 + $0x20] sm:$0xf]
    %v411 = vld [vmem:[#allocation8 + $0x24] sm:$0xf]
    %v412 = vld [vmem:[#allocation8 + $0x28] sm:$0xf]
    %v413 = vld [vmem:[#allocation8 + $0x2c] sm:$0xf]
    %v414 = vld [vmem:[#allocation8 + $0x30] sm:$0xf]
    %v415 = vld [vmem:[#allocation8 + $0x34] sm:$0xf]
    %v416 = vld [vmem:[#allocation8 + $0x38] sm:$0xf]
    %v417 = vld [vmem:[#allocation8 + $0x3c] sm:$0xf]
    %v418 = vld [vmem:[%s6] sm:$0x1]
    %v420 = vlaneseq
    %v421 = vshrl.u32 %v420, 7
    %v422 = vsub.s32 0, %v421
    %v423 = vrot.slane %v418, %v422
    %v441 = vunpack.c.l.b16 %v402
    %v442 = vunpack.c.l.b16 %v403
    %v443 = vunpack.c.l.b16 %v404
    %v444 = vunpack.c.l.b16 %v405
    %v445 = vunpack.c.l.b16 %v406
    %v446 = vunpack.c.l.b16 %v407
    %v447 = vunpack.c.l.b16 %v408
    %v448 = vunpack.c.l.b16 %v409
    %v449 = vunpack.c.l.b16 %v410
    %v450 = vunpack.c.l.b16 %v411
    %v451 = vunpack.c.l.b16 %v412
    %v452 = vunpack.c.l.b16 %v413
    %v453 = vunpack.c.l.b16 %v414
    %v454 = vunpack.c.l.b16 %v415
    %v455 = vunpack.c.l.b16 %v416
    %v456 = vunpack.c.l.b16 %v417
    %v457 = vpack.c.b16 %v442, %v441
    %v458 = vpack.c.b16 %v444, %v443
    %v459 = vpack.c.b16 %v446, %v445
    %v460 = vpack.c.b16 %v448, %v447
    %v461 = vpack.c.b16 %v450, %v449
    %v462 = vpack.c.b16 %v452, %v451
    %v463 = vpack.c.b16 %v454, %v453
    %v464 = vpack.c.b16 %v456, %v455
    %473 = vmatprep.subr.bf16.mxu0 0
    %474 = vmatpush1.bf16.msra.mxu0 %v457
    %475 = vmatprep.subr.bf16.mxu0 0
    %476 = vmatpush1.bf16.msra.mxu0 %v458
    %477 = vmatprep.subr.bf16.mxu0 0
    %478 = vmatpush1.bf16.msra.mxu0 %v459
    %479 = vmatprep.subr.bf16.mxu0 0
    %480 = vmatpush1.bf16.msra.mxu0 %v460
    %481 = vmatprep.subr.bf16.mxu0 0
    %482 = vmatpush1.bf16.msra.mxu0 %v461
    %483 = vmatprep.subr.bf16.mxu0 0
    %484 = vmatpush1.bf16.msra.mxu0 %v462
    %485 = vmatprep.subr.bf16.mxu0 0
    %486 = vmatpush1.bf16.msra.mxu0 %v463
    %487 = vmatprep.subr.bf16.mxu0 0
    %488 = vmatpush1.bf16.msra.mxu0 %v464
    %489 = vmatprep.subr.bf16.mxu0 0
    %490 = vmatpush1.bf16.msra.mxu0 0
    %491 = vmatprep.subr.bf16.mxu0 0
    %492 = vmatpush1.bf16.msra.mxu0 0
    %493 = vmatprep.subr.bf16.mxu0 0
    %494 = vmatpush1.bf16.msra.mxu0 0
    %495 = vmatprep.subr.bf16.mxu0 0
    %496 = vmatpush1.bf16.msra.mxu0 0
    %497 = vmatprep.subr.bf16.mxu0 0
    %498 = vmatpush1.bf16.msra.mxu0 0
    %499 = vmatprep.subr.bf16.mxu0 0
    %500 = vmatpush1.bf16.msra.mxu0 0
    %501 = vmatprep.subr.bf16.mxu0 0
    %502 = vmatpush1.bf16.msra.mxu0 0
    %503 = vmatprep.subr.bf16.mxu0 0
    %504 = vmatpush1.bf16.msra.mxu0 0
    %505 = vmatprep.mubr.bf16.mxu0 0
    %506 = vmatmul.mubr.bf16.gmra.mrb[0].mxu0 %v401
    %v507 = vpop.f32.mrb[0].mxu0
    %v508 = vadd.f32 %v423, %v507
    %v509 = vpop.f32.mrb[0].mxu0
    %v510 = vpop.f32.mrb[0].mxu0
    %v511 = vadd.f32 %v423, %v510
    %v512 = vpop.f32.mrb[0].mxu0
    %513 = vdwg.mxu0
    %v514 = vmax.f32 %v508, 0.0
    %v515 = vmax.f32 %v511, 0.0
    %v516 = vpack.c.bf16 %v515, %v514
    %517 = vmatprep.subr.bf16.mxu0 0
    %518 = vmatpush1.bf16.msra.mxu0 %v516
    %519 = vmatprep.subr.bf16.mxu0 0
    %520 = vmatpush1.bf16.msra.mxu0 0
    %521 = vmatprep.subr.bf16.mxu0 0
    %522 = vmatpush1.bf16.msra.mxu0 0
    %523 = vmatprep.subr.bf16.mxu0 0
    %524 = vmatpush1.bf16.msra.mxu0 0
    %525 = vmatprep.subr.bf16.mxu0 0
    %526 = vmatpush1.bf16.msra.mxu0 0
    %527 = vmatprep.subr.bf16.mxu0 0
    %528 = vmatpush1.bf16.msra.mxu0 0
    %529 = vmatprep.subr.bf16.mxu0 0
    %530 = vmatpush1.bf16.msra.mxu0 0
    %531 = vmatprep.subr.bf16.mxu0 0
    %532 = vmatpush1.bf16.msra.mxu0 0
    %533 = vmatprep.subr.bf16.mxu0 0
    %534 = vmatpush1.bf16.msra.mxu0 0
    %535 = vmatprep.subr.bf16.mxu0 0
    %536 = vmatpush1.bf16.msra.mxu0 0
    %537 = vmatprep.subr.bf16.mxu0 0
    %538 = vmatpush1.bf16.msra.mxu0 0
    %539 = vmatprep.subr.bf16.mxu0 0
    %540 = vmatpush1.bf16.msra.mxu0 0
    %541 = vmatprep.subr.bf16.mxu0 0
    %542 = vmatpush1.bf16.msra.mxu0 0
    %543 = vmatprep.subr.bf16.mxu0 0
    %544 = vmatpush1.bf16.msra.mxu0 0
    %545 = vmatprep.subr.bf16.mxu0 0
    %546 = vmatpush1.bf16.msra.mxu0 0
    %547 = vmatprep.subr.bf16.mxu0 0
    %548 = vmatpush1.bf16.msra.mxu0 0
    %549 = vmatprep.mubr.bf16.mxu0 0
    %550 = vmatmul.mubr.bf16.gmra.mrb[0].mxu0 %v314
    %v551 = vpop.f32.mrb[0].mxu0
    %v552 = vadd.f32 0.0, %v551
    %v553 = vpop.f32.mrb[0].mxu0
    %v554 = vpop.f32.mrb[0].mxu0
    %v555 = vadd.f32 0.0, %v554
    %v556 = vpop.f32.mrb[0].mxu0
    %557 = vdwg.mxu0
    %v558 = vpack.c.bf16 %v555, %v552
    %v559 = vld [vmem:[#allocation10] sm:$0xf]
    %v560 = vld [vmem:[#allocation10 + $0x4] sm:$0xf]
    %v561 = vld [vmem:[#allocation10 + $0x8] sm:$0xf]
    %v562 = vld [vmem:[#allocation10 + $0xc] sm:$0xf]
    %v563 = vld [vmem:[#allocation10 + $0x10] sm:$0xf]
    %v564 = vld [vmem:[#allocation10 + $0x14] sm:$0xf]
    %v565 = vld [vmem:[#allocation10 + $0x18] sm:$0xf]
    %v566 = vld [vmem:[#allocation10 + $0x1c] sm:$0xf]
    %v567 = vld [vmem:[#allocation10 + $0x20] sm:$0xf]
    %v568 = vld [vmem:[#allocation10 + $0x24] sm:$0xf]
    %v569 = vld [vmem:[#allocation10 + $0x28] sm:$0xf]
    %v570 = vld [vmem:[#allocation10 + $0x2c] sm:$0xf]
    %v571 = vld [vmem:[#allocation10 + $0x30] sm:$0xf]
    %v572 = vld [vmem:[#allocation10 + $0x34] sm:$0xf]
    %v573 = vld [vmem:[#allocation10 + $0x38] sm:$0xf]
    %v574 = vld [vmem:[#allocation10 + $0x3c] sm:$0xf]
    %v575 = vld [vmem:[%s8] sm:$0x1]
    %v577 = vlaneseq
    %v578 = vshrl.u32 %v577, 7
    %v579 = vsub.s32 0, %v578
    %v580 = vrot.slane %v575, %v579
    %v598 = vunpack.c.l.b16 %v559
    %v599 = vunpack.c.l.b16 %v560
    %v600 = vunpack.c.l.b16 %v561
    %v601 = vunpack.c.l.b16 %v562
    %v602 = vunpack.c.l.b16 %v563
    %v603 = vunpack.c.l.b16 %v564
    %v604 = vunpack.c.l.b16 %v565
    %v605 = vunpack.c.l.b16 %v566
    %v606 = vunpack.c.l.b16 %v567
    %v607 = vunpack.c.l.b16 %v568
    %v608 = vunpack.c.l.b16 %v569
    %v609 = vunpack.c.l.b16 %v570
    %v610 = vunpack.c.l.b16 %v571
    %v611 = vunpack.c.l.b16 %v572
    %v612 = vunpack.c.l.b16 %v573
    %v613 = vunpack.c.l.b16 %v574
    %v614 = vpack.c.b16 %v599, %v598
    %v615 = vpack.c.b16 %v601, %v600
    %v616 = vpack.c.b16 %v603, %v602
    %v617 = vpack.c.b16 %v605, %v604
    %v618 = vpack.c.b16 %v607, %v606
    %v619 = vpack.c.b16 %v609, %v608
    %v620 = vpack.c.b16 %v611, %v610
    %v621 = vpack.c.b16 %v613, %v612
    %630 = vmatprep.subr.bf16.mxu0 0
    %631 = vmatpush1.bf16.msra.mxu0 %v614
    %632 = vmatprep.subr.bf16.mxu0 0
    %633 = vmatpush1.bf16.msra.mxu0 %v615
    %634 = vmatprep.subr.bf16.mxu0 0
    %635 = vmatpush1.bf16.msra.mxu0 %v616
    %636 = vmatprep.subr.bf16.mxu0 0
    %637 = vmatpush1.bf16.msra.mxu0 %v617
    %638 = vmatprep.subr.bf16.mxu0 0
    %639 = vmatpush1.bf16.msra.mxu0 %v618
    %640 = vmatprep.subr.bf16.mxu0 0
    %641 = vmatpush1.bf16.msra.mxu0 %v619
    %642 = vmatprep.subr.bf16.mxu0 0
    %643 = vmatpush1.bf16.msra.mxu0 %v620
    %644 = vmatprep.subr.bf16.mxu0 0
    %645 = vmatpush1.bf16.msra.mxu0 %v621
    %646 = vmatprep.subr.bf16.mxu0 0
    %647 = vmatpush1.bf16.msra.mxu0 0
    %648 = vmatprep.subr.bf16.mxu0 0
    %649 = vmatpush1.bf16.msra.mxu0 0
    %650 = vmatprep.subr.bf16.mxu0 0
    %651 = vmatpush1.bf16.msra.mxu0 0
    %652 = vmatprep.subr.bf16.mxu0 0
    %653 = vmatpush1.bf16.msra.mxu0 0
    %654 = vmatprep.subr.bf16.mxu0 0
    %655 = vmatpush1.bf16.msra.mxu0 0
    %656 = vmatprep.subr.bf16.mxu0 0
    %657 = vmatpush1.bf16.msra.mxu0 0
    %658 = vmatprep.subr.bf16.mxu0 0
    %659 = vmatpush1.bf16.msra.mxu0 0
    %660 = vmatprep.subr.bf16.mxu0 0
    %661 = vmatpush1.bf16.msra.mxu0 0
    %662 = vmatprep.mubr.bf16.mxu0 0
    %663 = vmatmul.mubr.bf16.gmra.mrb[0].mxu0 %v558
    %v664 = vpop.f32.mrb[0].mxu0
    %v665 = vadd.f32 %v580, %v664
    %v666 = vpop.f32.mrb[0].mxu0
    %v667 = vpop.f32.mrb[0].mxu0
    %v668 = vadd.f32 %v580, %v667
    %v669 = vpop.f32.mrb[0].mxu0
    %670 = vdwg.mxu0
    %v671 = vmax.f32 %v665, 0.0
    %v672 = vmax.f32 %v668, 0.0
    %v673 = vpack.c.bf16 %v672, %v671
    %674 = vmatprep.subr.bf16.mxu0 0
    %675 = vmatpush1.bf16.msra.mxu0 %v673
    %676 = vmatprep.subr.bf16.mxu0 0
    %677 = vmatpush1.bf16.msra.mxu0 0
    %678 = vmatprep.subr.bf16.mxu0 0
    %679 = vmatpush1.bf16.msra.mxu0 0
    %680 = vmatprep.subr.bf16.mxu0 0
    %681 = vmatpush1.bf16.msra.mxu0 0
    %682 = vmatprep.subr.bf16.mxu0 0
    %683 = vmatpush1.bf16.msra.mxu0 0
    %684 = vmatprep.subr.bf16.mxu0 0
    %685 = vmatpush1.bf16.msra.mxu0 0
    %686 = vmatprep.subr.bf16.mxu0 0
    %687 = vmatpush1.bf16.msra.mxu0 0
    %688 = vmatprep.subr.bf16.mxu0 0
    %689 = vmatpush1.bf16.msra.mxu0 0
    %690 = vmatprep.subr.bf16.mxu0 0
    %691 = vmatpush1.bf16.msra.mxu0 0
    %692 = vmatprep.subr.bf16.mxu0 0
    %693 = vmatpush1.bf16.msra.mxu0 0
    %694 = vmatprep.subr.bf16.mxu0 0
    %695 = vmatpush1.bf16.msra.mxu0 0
    %696 = vmatprep.subr.bf16.mxu0 0
    %697 = vmatpush1.bf16.msra.mxu0 0
    %698 = vmatprep.subr.bf16.mxu0 0
    %699 = vmatpush1.bf16.msra.mxu0 0
    %700 = vmatprep.subr.bf16.mxu0 0
    %701 = vmatpush1.bf16.msra.mxu0 0
    %702 = vmatprep.subr.bf16.mxu0 0
    %703 = vmatpush1.bf16.msra.mxu0 0
    %704 = vmatprep.subr.bf16.mxu0 0
    %705 = vmatpush1.bf16.msra.mxu0 0
    %706 = vmatprep.mubr.bf16.mxu0 0
    %707 = vmatmul.mubr.bf16.gmra.mrb[0].mxu0 %v314
    %v708 = vpop.f32.mrb[0].mxu0
    %v709 = vadd.f32 0.0, %v708
    %v710 = vpop.f32.mrb[0].mxu0
    %v711 = vpop.f32.mrb[0].mxu0
    %v712 = vadd.f32 0.0, %v711
    %v713 = vpop.f32.mrb[0].mxu0
    %714 = vdwg.mxu0
    %v715 = vpack.c.bf16 %v712, %v709
    %v716 = vld [vmem:[#allocation11] sm:$0xf]
    %v717 = vld [vmem:[#allocation11 + $0x4] sm:$0xf]
    %v718 = vld [vmem:[#allocation11 + $0x8] sm:$0xf]
    %v719 = vld [vmem:[#allocation11 + $0xc] sm:$0xf]
    %v720 = vld [vmem:[#allocation11 + $0x10] sm:$0xf]
    %v721 = vld [vmem:[#allocation11 + $0x14] sm:$0xf]
    %v722 = vld [vmem:[#allocation11 + $0x18] sm:$0xf]
    %v723 = vld [vmem:[#allocation11 + $0x1c] sm:$0xf]
    %v724 = vld [vmem:[#allocation11 + $0x20] sm:$0xf]
    %v725 = vld [vmem:[#allocation11 + $0x24] sm:$0xf]
    %v726 = vld [vmem:[#allocation11 + $0x28] sm:$0xf]
    %v727 = vld [vmem:[#allocation11 + $0x2c] sm:$0xf]
    %v728 = vld [vmem:[#allocation11 + $0x30] sm:$0xf]
    %v729 = vld [vmem:[#allocation11 + $0x34] sm:$0xf]
    %v730 = vld [vmem:[#allocation11 + $0x38] sm:$0xf]
    %v731 = vld [vmem:[#allocation11 + $0x3c] sm:$0xf]
    %v732 = vld [vmem:[%s10] sm:$0x1]
    %v734 = vlaneseq
    %v735 = vshrl.u32 %v734, 7
    %v736 = vsub.s32 0, %v735
    %v737 = vrot.slane %v732, %v736
    %v755 = vunpack.c.l.b16 %v716
    %v756 = vunpack.c.l.b16 %v717
    %v757 = vunpack.c.l.b16 %v718
    %v758 = vunpack.c.l.b16 %v719
    %v759 = vunpack.c.l.b16 %v720
    %v760 = vunpack.c.l.b16 %v721
    %v761 = vunpack.c.l.b16 %v722
    %v762 = vunpack.c.l.b16 %v723
    %v763 = vunpack.c.l.b16 %v724
    %v764 = vunpack.c.l.b16 %v725
    %v765 = vunpack.c.l.b16 %v726
    %v766 = vunpack.c.l.b16 %v727
    %v767 = vunpack.c.l.b16 %v728
    %v768 = vunpack.c.l.b16 %v729
    %v769 = vunpack.c.l.b16 %v730
    %v770 = vunpack.c.l.b16 %v731
    %v771 = vpack.c.b16 %v756, %v755
    %v772 = vpack.c.b16 %v758, %v757
    %v773 = vpack.c.b16 %v760, %v759
    %v774 = vpack.c.b16 %v762, %v761
    %v775 = vpack.c.b16 %v764, %v763
    %v776 = vpack.c.b16 %v766, %v765
    %v777 = vpack.c.b16 %v768, %v767
    %v778 = vpack.c.b16 %v770, %v769
    %787 = vmatprep.subr.bf16.mxu0 0
    %788 = vmatpush1.bf16.msra.mxu0 %v771
    %789 = vmatprep.subr.bf16.mxu0 0
    %790 = vmatpush1.bf16.msra.mxu0 %v772
    %791 = vmatprep.subr.bf16.mxu0 0
    %792 = vmatpush1.bf16.msra.mxu0 %v773
    %793 = vmatprep.subr.bf16.mxu0 0
    %794 = vmatpush1.bf16.msra.mxu0 %v774
    %795 = vmatprep.subr.bf16.mxu0 0
    %796 = vmatpush1.bf16.msra.mxu0 %v775
    %797 = vmatprep.subr.bf16.mxu0 0
    %798 = vmatpush1.bf16.msra.mxu0 %v776
    %799 = vmatprep.subr.bf16.mxu0 0
    %800 = vmatpush1.bf16.msra.mxu0 %v777
    %801 = vmatprep.subr.bf16.mxu0 0
    %802 = vmatpush1.bf16.msra.mxu0 %v778
    %803 = vmatprep.subr.bf16.mxu0 0
    %804 = vmatpush1.bf16.msra.mxu0 0
    %805 = vmatprep.subr.bf16.mxu0 0
    %806 = vmatpush1.bf16.msra.mxu0 0
    %807 = vmatprep.subr.bf16.mxu0 0
    %808 = vmatpush1.bf16.msra.mxu0 0
    %809 = vmatprep.subr.bf16.mxu0 0
    %810 = vmatpush1.bf16.msra.mxu0 0
    %811 = vmatprep.subr.bf16.mxu0 0
    %812 = vmatpush1.bf16.msra.mxu0 0
    %813 = vmatprep.subr.bf16.mxu0 0
    %814 = vmatpush1.bf16.msra.mxu0 0
    %815 = vmatprep.subr.bf16.mxu0 0
    %816 = vmatpush1.bf16.msra.mxu0 0
    %817 = vmatprep.subr.bf16.mxu0 0
    %818 = vmatpush1.bf16.msra.mxu0 0
    %819 = vmatprep.mubr.bf16.mxu0 0
    %820 = vmatmul.mubr.bf16.gmra.mrb[0].mxu0 %v715
    %v821 = vpop.f32.mrb[0].mxu0
    %v822 = vadd.f32 %v737, %v821
    %v823 = vpop.f32.mrb[0].mxu0
    %v824 = vpop.f32.mrb[0].mxu0
    %v825 = vadd.f32 %v737, %v824
    %v826 = vpop.f32.mrb[0].mxu0
    %827 = vdwg.mxu0
    %v828 = vadd.f32 %v822, %v297
    %v829 = vadd.f32 %v825, %v298
    %v830 = vmax.f32 %v828, 0.0
    %v831 = vmax.f32 %v829, 0.0
    %v832 = vpack.c.bf16 %v831, %v830
    %v833 = vld [vmem:[#allocation13] sm:$0xf]
    %v834 = vld [vmem:[#allocation13 + $0x4] sm:$0xf]
    %v835 = vld [vmem:[#allocation13 + $0x8] sm:$0xf]
    %v836 = vld [vmem:[#allocation13 + $0xc] sm:$0xf]
    %v837 = vld [vmem:[#allocation13 + $0x10] sm:$0xf]
    %v838 = vld [vmem:[#allocation13 + $0x14] sm:$0xf]
    %v839 = vld [vmem:[#allocation13 + $0x18] sm:$0xf]
    %v840 = vld [vmem:[#allocation13 + $0x1c] sm:$0xf]
    %v841 = vld [vmem:[#allocation13 + $0x20] sm:$0xf]
    %v842 = vld [vmem:[#allocation13 + $0x24] sm:$0xf]
    %v843 = vld [vmem:[#allocation13 + $0x28] sm:$0xf]
    %v844 = vld [vmem:[#allocation13 + $0x2c] sm:$0xf]
    %v845 = vld [vmem:[#allocation13 + $0x30] sm:$0xf]
    %v846 = vld [vmem:[#allocation13 + $0x34] sm:$0xf]
    %v847 = vld [vmem:[#allocation13 + $0x38] sm:$0xf]
    %v848 = vld [vmem:[#allocation13 + $0x3c] sm:$0xf]
    %v849 = vld [vmem:[%s12] sm:$0x1]
    %v851 = vlaneseq
    %v852 = vshrl.u32 %v851, 7
    %v853 = vsub.s32 0, %v852
    %v854 = vrot.slane %v849, %v853
    %v872 = vunpack.c.l.b16 %v833
    %v873 = vunpack.c.l.b16 %v834
    %v874 = vunpack.c.l.b16 %v835
    %v875 = vunpack.c.l.b16 %v836
    %v876 = vunpack.c.l.b16 %v837
    %v877 = vunpack.c.l.b16 %v838
    %v878 = vunpack.c.l.b16 %v839
    %v879 = vunpack.c.l.b16 %v840
    %v880 = vunpack.c.l.b16 %v841
    %v881 = vunpack.c.l.b16 %v842
    %v882 = vunpack.c.l.b16 %v843
    %v883 = vunpack.c.l.b16 %v844
    %v884 = vunpack.c.l.b16 %v845
    %v885 = vunpack.c.l.b16 %v846
    %v886 = vunpack.c.l.b16 %v847
    %v887 = vunpack.c.l.b16 %v848
    %v888 = vpack.c.b16 %v873, %v872
    %v889 = vpack.c.b16 %v875, %v874
    %v890 = vpack.c.b16 %v877, %v876
    %v891 = vpack.c.b16 %v879, %v878
    %v892 = vpack.c.b16 %v881, %v880
    %v893 = vpack.c.b16 %v883, %v882
    %v894 = vpack.c.b16 %v885, %v884
    %v895 = vpack.c.b16 %v887, %v886
    %904 = vmatprep.subr.bf16.mxu0 0
    %905 = vmatpush1.bf16.msra.mxu0 %v888
    %906 = vmatprep.subr.bf16.mxu0 0
    %907 = vmatpush1.bf16.msra.mxu0 %v889
    %908 = vmatprep.subr.bf16.mxu0 0
    %909 = vmatpush1.bf16.msra.mxu0 %v890
    %910 = vmatprep.subr.bf16.mxu0 0
    %911 = vmatpush1.bf16.msra.mxu0 %v891
    %912 = vmatprep.subr.bf16.mxu0 0
    %913 = vmatpush1.bf16.msra.mxu0 %v892
    %914 = vmatprep.subr.bf16.mxu0 0
    %915 = vmatpush1.bf16.msra.mxu0 %v893
    %916 = vmatprep.subr.bf16.mxu0 0
    %917 = vmatpush1.bf16.msra.mxu0 %v894
    %918 = vmatprep.subr.bf16.mxu0 0
    %919 = vmatpush1.bf16.msra.mxu0 %v895
    %920 = vmatprep.subr.bf16.mxu0 0
    %921 = vmatpush1.bf16.msra.mxu0 0
    %922 = vmatprep.subr.bf16.mxu0 0
    %923 = vmatpush1.bf16.msra.mxu0 0
    %924 = vmatprep.subr.bf16.mxu0 0
    %925 = vmatpush1.bf16.msra.mxu0 0
    %926 = vmatprep.subr.bf16.mxu0 0
    %927 = vmatpush1.bf16.msra.mxu0 0
    %928 = vmatprep.subr.bf16.mxu0 0
    %929 = vmatpush1.bf16.msra.mxu0 0
    %930 = vmatprep.subr.bf16.mxu0 0
    %931 = vmatpush1.bf16.msra.mxu0 0
    %932 = vmatprep.subr.bf16.mxu0 0
    %933 = vmatpush1.bf16.msra.mxu0 0
    %934 = vmatprep.subr.bf16.mxu0 0
    %935 = vmatpush1.bf16.msra.mxu0 0
    %936 = vmatprep.mubr.bf16.mxu0 0
    %937 = vmatmul.mubr.bf16.gmra.mrb[0].mxu0 %v832
    %v938 = vpop.f32.mrb[0].mxu0
    %v939 = vadd.f32 %v854, %v938
    %v940 = vpop.f32.mrb[0].mxu0
    %v941 = vpop.f32.mrb[0].mxu0
    %v942 = vadd.f32 %v854, %v941
    %v943 = vpop.f32.mrb[0].mxu0
    %944 = vdwg.mxu0
    %945 = vst [vmem:[#allocation14] sm:$0xff] %v939
    %946 = vst [vmem:[#allocation14 + $0x8] sm:$0xff] %v942
    // Predicated region
    $region82: #{tpu_custom_call.1} parent=1 // pred_check
      _
    $region83: #{tpu_custom_call.1} parent=1 // pred_check_branch
      %948 = sbr.rel (0) target = $region85
    $region84: #{tpu_custom_call.1} parent=1 // pred_region
      %s950 = ssub.s32 256, 256
      %951 = vsyncadd [#allocation4], %s950
      %s952 = sshll.u32 [#allocation14], 4
      %s953 = int_to_ptr.vmem [resolvable:$true] %s952
      %958 = dma.vmem_to_hbm [thread:$0]  %s953, 256, %s13, [#allocation4], 128, 128, 8
    $region85: #{tpu_custom_call.1} parent=1 // pred_fallthru
      _
    // Predicated region
    $region86: #{tpu_custom_call.1} parent=1 // pred_check
      _
    $region87: #{tpu_custom_call.1} parent=1 // pred_check_branch
      %960 = sbr.rel (0) target = $region89
    $region88: #{tpu_custom_call.1} parent=1 // pred_region
      %961 = dma.done [#allocation4], 256
    $region89: #{tpu_custom_call.1} parent=1 // pred_fallthru
      _
    %962 = vsyncpa [#allocation3], 1
    %963 = vsyncpa [#allocation6], 1
    %964 = vsyncpa [#allocation9], 1
    %965 = vsyncpa [#allocation12], 1
    %966 = vsyncpa [#allocation4], 1

</llo_original>
